<compile_context>
chip_gen: v7x
topology: tpu7x:2x2x1
jax: 0.10.0
libtpu: 0.0.40
codegen_flags: <defaults>
</compile_context>

<pallas_src>
import jax
import jax.numpy as jnp
from jax import lax
from jax.experimental import pallas as pl
from jax.experimental.pallas import tpu as pltpu


_LANE = 128
_SUBLANE = 8
_TARGET_TILE_BYTES = 4 * 1024 * 1024   # streamed HBM bytes per obs tile
_VMEM_BUDGET = 24 * 1024 * 1024        # headroom under the 32 MiB scoped limit (v7x-safe)
_VMEM_LIMIT_BYTES = 32 * 1024 * 1024


def _round_up(x: int, m: int) -> int:
    return ((x + m - 1) // m) * m


def _cdiv(a: int, b: int) -> int:
    return (a + b - 1) // b


def _choose_batch_tile(B: int, obs_dim: int, H: int, max_block_b=None) -> int:
    """Rows of obs per grid step, sized by a VMEM byte budget (not a fixed count)."""
    # Amortize the ~0.35 us per-grid-step fixed cost with MiB-scale tiles.
    tb = _round_up(max(_TARGET_TILE_BYTES // (4 * obs_dim), _LANE), _LANE)

    # Keep >=4 grid steps for larger batches so dimension_semantics=("parallel",)
    # can split the batch axis across both TensorCores on v7x.
    if B > 2 * _LANE:
        tb = min(tb, _round_up(_cdiv(B, 4), _LANE))

    # VMEM cap. Account for VMEM layout padding: the (tb, obs_dim) tile pads its
    # minor dim up to 128 lanes; (H, tb) activations pad H up to 8 sublanes.
    lane_obs = _round_up(obs_dim, _LANE)
    sub_h = _round_up(H, _SUBLANE)
    weight_bytes = 2 * 4 * (sub_h * lane_obs                 # w1 (double-buffered)
                            + sub_h * _round_up(H, _LANE)    # w2
                            + 3 * sub_h * _LANE)             # w3, b12 (padded, generous)
    per_row_bytes = 4 * (2 * lane_obs       # double-buffered obs tile
                         + 2 * _SUBLANE     # double-buffered (1, tb) output row
                         + 4 * sub_h)       # h1/h2 (+ temporaries), (H, tb) f32
    vmem_rows = max((_VMEM_BUDGET - weight_bytes) // per_row_bytes, _LANE)
    tb = min(tb, (vmem_rows // _LANE) * _LANE)

    if max_block_b is not None:
        tb = min(tb, max((int(max_block_b) // _LANE) * _LANE, _LANE))  # lane-aligned

    tb = max(tb, _LANE)
    # Whole batch fits in a single tile: use the exact size (no padding/masking).
    if tb >= B:
        return B
    return tb


def _critic_kernel(x_ref, w1_ref, w2_ref, w3_ref, b12_ref, b3_ref, out_ref):
    """One batch tile of the fused 3-layer MLP, computed feature-major.

    x_ref  : (TB, obs_dim) f32  -- obs tile in its natural (batch-major) layout
    w1_ref : (H, obs_dim)  f32  -- PyTorch-native (out, in) layout
    w2_ref : (H, H)        f32
    w3_ref : (H, 1)        f32
    b12_ref: (H, 2)        f32  -- [:,0] = b1, [:,1] = b2 (column vectors)
    b3_ref : (1,)          f32  -- scalar in SMEM
    out_ref: (1, TB)       f32  -- lane-dense output row (batch on lanes)
    """
    x = x_ref[...]                           # (TB, obs_dim)
    b1 = b12_ref[:, 0:1]                     # (H, 1)
    b2 = b12_ref[:, 1:2]                     # (H, 1)

    # Layer 1 + tanh: contract both minor dims (w1 @ x^T) -> (H, TB).
    # The trans-B dot_general keeps the streamed tile untouched (no in-kernel
    # transpose copy) while keeping activations feature-major (batch on lanes).
    h1 = jnp.tanh(
        lax.dot_general(w1_ref[...], x, (((1,), (1,)), ((), ())),
                        preferred_element_type=jnp.float32) + b1
    )                                        # (H, TB)
    # Layer 2 + tanh (standard MXU matmul, f32 accumulate).
    h2 = jnp.tanh(
        jnp.dot(w2_ref[...], h1, preferred_element_type=jnp.float32) + b2
    )                                        # (H, TB)
    # Layer 3 (H -> 1): VPU multiply + sublane reduce; result is already the
    # lane-dense (1, TB) row we store.
    out_ref[...] = jnp.sum(h2 * w3_ref[...], axis=0, keepdims=True) + b3_ref[0]


def critic_forward(obs, params, *, max_block_b=None):
    """Fused Critic forward. obs: (B, obs_dim) f32. Returns (B,) f32 (== .view(-1))."""
    w1, w2, w3, b12, b3 = params
    obs = jnp.asarray(obs, jnp.float32)      # mirrors torch.as_tensor(..., float32)
    B, obs_dim = obs.shape
    H = w1.shape[0]

    tb = _choose_batch_tile(B, obs_dim, H, max_block_b)
    grid = (_cdiv(B, tb),)

    out_row = pl.pallas_call(
        _critic_kernel,
        out_shape=jax.ShapeDtypeStruct((1, B), jnp.float32),
        grid=grid,
        in_specs=[
            # Streamed per-tile input, natural layout (double-buffered by Pallas).
            pl.BlockSpec((tb, obs_dim), lambda i: (i, 0)),
            # Weights / biases: constant block index -> fetched once, stay resident.
            pl.BlockSpec((H, obs_dim), lambda i: (0, 0)),
            pl.BlockSpec((H, H), lambda i: (0, 0)),
            pl.BlockSpec((H, 1), lambda i: (0, 0)),
            pl.BlockSpec((H, 2), lambda i: (0, 0)),
            # Final bias is a single scalar: keep it in SMEM.
            pl.BlockSpec(memory_space=pltpu.MemorySpace.SMEM),
        ],
        out_specs=pl.BlockSpec((1, tb), lambda i: (0, i)),
        compiler_params=pltpu.CompilerParams(
            # Batch tiles are independent -> shard across TensorCores (v7x megacore).
            dimension_semantics=("parallel",),
            vmem_limit_bytes=_VMEM_LIMIT_BYTES,
        ),
        cost_estimate=pl.CostEstimate(
            flops=2 * B * (obs_dim * H + H * H + H),
            transcendentals=2 * B * H,
            bytes_accessed=4 * (B * obs_dim + B + obs_dim * H + H * H + 3 * H + 1),
        ),
    )(obs, w1, w2, w3, b12, b3)

    return out_row.reshape(-1)


def init_critic_params(key, obs_dim, neuron_num):
    """PyTorch nn.Linear default init: U(-1/sqrt(fan_in), +1/sqrt(fan_in)).

    Weights use PyTorch's native (out_features, in_features) layout, which is what
    the feature-major kernel consumes. b1/b2 are packed into one (H, 2) slab; b3 is
    a (1,) scalar (lives in SMEM inside the kernel).
    """
    ks = jax.random.split(key, 6)

    def uniform(k, shape, fan_in):
        bound = 1.0 / jnp.sqrt(jnp.float32(fan_in))
        return jax.random.uniform(k, shape, jnp.float32, -bound, bound)

    w1 = uniform(ks[0], (neuron_num, obs_dim), obs_dim)        # (H, obs_dim)
    b1 = uniform(ks[1], (neuron_num, 1), obs_dim)              # (H, 1)
    w2 = uniform(ks[2], (neuron_num, neuron_num), neuron_num)  # (H, H)
    b2 = uniform(ks[3], (neuron_num, 1), neuron_num)           # (H, 1)
    w3 = uniform(ks[4], (neuron_num, 1), neuron_num)           # (H, 1) == torch (1,H).T
    b3 = uniform(ks[5], (1,), neuron_num)                      # (1,)
    b12 = jnp.concatenate([b1, b2], axis=1)                    # (H, 2)
    return (w1, w2, w3, b12, b3)


def critic_reference(obs, params):
    """Pure-JAX reference matching PyTorch semantics, for correctness checks."""
    w1, w2, w3, b12, b3 = params
    h1 = jnp.tanh(obs @ w1.T + b12[:, 0])
    h2 = jnp.tanh(h1 @ w2.T + b12[:, 1])
    return (h2 @ w3 + b3).reshape(-1)


if __name__ == "__main__":
    key = jax.random.PRNGKey(0)
    k_obs, k_params, k_obs2 = jax.random.split(key, 3)

    obs_dim = 16
    neuron_num = 32
    params = init_critic_params(k_params, obs_dim, neuron_num)

    # Small batch: exercises the exact single-tile path (no padding, no masking).
    obs = jax.random.normal(k_obs, (8, obs_dim), dtype=jnp.float32)
    out = jax.block_until_ready(critic_forward(obs, params))
    ref = critic_reference(obs, params)
    assert out.shape == (8,), out.shape
    assert jnp.allclose(out, ref, atol=1e-4, rtol=1e-4), (out, ref)

    # Larger batch (not a multiple of the tile): exercises the multi-step pipelined
    # path with a masked boundary tile.
    obs2 = jax.random.normal(k_obs2, (1000, obs_dim), dtype=jnp.float32)
    out2 = jax.block_until_ready(critic_forward(obs2, params))
    ref2 = critic_reference(obs2, params)
    assert out2.shape == (1000,), out2.shape
    assert jnp.allclose(out2, ref2, atol=1e-4, rtol=1e-4)

    print("KERNEL_OK")
</pallas_src>

<mosaic_0001>
module attributes {stable_mosaic.version = 11 : i64} {
  func.func @_critic_kernel(%arg0: i32, %arg1: memref<8x16xf32, #tpu.memory_space<vmem>>, %arg2: memref<32x16xf32, #tpu.memory_space<vmem>>, %arg3: memref<32x32xf32, #tpu.memory_space<vmem>>, %arg4: memref<32x1xf32, #tpu.memory_space<vmem>>, %arg5: memref<32x2xf32, #tpu.memory_space<vmem>>, %arg6: memref<1xf32, #tpu.memory_space<smem>>, %arg7: memref<1x8xf32, #tpu.memory_space<vmem>>) attributes {dimension_semantics = [#tpu.dimension_semantics<parallel>], iteration_bounds = array<i64: 1>, scalar_prefetch = 0 : i64, scratch_operands = 0 : i64, tpu.core_type = #tpu.core_type<tc>, window_params = [{transform_indices = @transform_0, window_bounds = array<i64: 8, 16>}, {pipeline_mode = #tpu.pipeline_mode<synchronous>, transform_indices = @transform_1, window_bounds = array<i64: 32, 16>}, {pipeline_mode = #tpu.pipeline_mode<synchronous>, transform_indices = @transform_2, window_bounds = array<i64: 32, 32>}, {pipeline_mode = #tpu.pipeline_mode<synchronous>, transform_indices = @transform_3, window_bounds = array<i64: 32, 1>}, {pipeline_mode = #tpu.pipeline_mode<synchronous>, transform_indices = @transform_4, window_bounds = array<i64: 32, 2>}, {transform_indices = @transform_5, window_bounds = array<i64: 1>}, {transform_indices = @transform_6, window_bounds = array<i64: 1, 8>}]} {
    %c0 = arith.constant 0 : index
    %c0_0 = arith.constant 0 : index
    %0 = vector.load %arg1[%c0, %c0_0] : memref<8x16xf32, #tpu.memory_space<vmem>>, vector<8x16xf32>
    %c0_1 = arith.constant 0 : index
    %c0_2 = arith.constant 0 : index
    %1 = vector.load %arg5[%c0_1, %c0_2] : memref<32x2xf32, #tpu.memory_space<vmem>>, vector<32x1xf32>
    %c0_3 = arith.constant 0 : index
    %c1 = arith.constant 1 : index
    %2 = vector.load %arg5[%c0_3, %c1] : memref<32x2xf32, #tpu.memory_space<vmem>>, vector<32x1xf32>
    %c0_4 = arith.constant 0 : index
    %c0_5 = arith.constant 0 : index
    %3 = vector.load %arg2[%c0_4, %c0_5] : memref<32x16xf32, #tpu.memory_space<vmem>>, vector<32x16xf32>
    %cst = arith.constant dense<0.000000e+00> : vector<32x8xf32>
    %4 = tpu.matmul %3, %0, %cst {dimension_numbers = #tpu.dot_dimension_numbers<[1], [1], [0], [0], [0, 0, 1, 0], [], []>} : vector<32x16xf32>, vector<8x16xf32>, vector<32x8xf32> -> vector<32x8xf32>
    %5 = vector.broadcast %1 : vector<32x1xf32> to vector<32x8xf32>
    %6 = arith.addf %4, %5 : vector<32x8xf32>
    %7 = math.tanh %6 : vector<32x8xf32>
    %c0_6 = arith.constant 0 : index
    %c0_7 = arith.constant 0 : index
    %8 = vector.load %arg3[%c0_6, %c0_7] : memref<32x32xf32, #tpu.memory_space<vmem>>, vector<32x32xf32>
    %cst_8 = arith.constant dense<0.000000e+00> : vector<32x8xf32>
    %9 = tpu.matmul %8, %7, %cst_8 {dimension_numbers = #tpu.dot_dimension_numbers<[1], [0], [0], [1], [0, 0, 1, 1], [], []>} : vector<32x32xf32>, vector<32x8xf32>, vector<32x8xf32> -> vector<32x8xf32>
    %10 = vector.broadcast %2 : vector<32x1xf32> to vector<32x8xf32>
    %11 = arith.addf %9, %10 : vector<32x8xf32>
    %12 = math.tanh %11 : vector<32x8xf32>
    %c0_9 = arith.constant 0 : index
    %c0_10 = arith.constant 0 : index
    %13 = vector.load %arg4[%c0_9, %c0_10] : memref<32x1xf32, #tpu.memory_space<vmem>>, vector<32x1xf32>
    %14 = vector.broadcast %13 : vector<32x1xf32> to vector<32x8xf32>
    %15 = arith.mulf %12, %14 : vector<32x8xf32>
    %cst_11 = arith.constant dense<0.000000e+00> : vector<8xf32>
    %16 = vector.multi_reduction <add>, %15, %cst_11 [0] : vector<32x8xf32> to vector<8xf32>
    %17 = vector.shape_cast %16 : vector<8xf32> to vector<1x8xf32>
    %c0_12 = arith.constant 0 : index
    %18 = memref.load %arg6[%c0_12] : memref<1xf32, #tpu.memory_space<smem>>
    %19 = vector.broadcast %18 : f32 to vector<1x8xf32>
    %20 = arith.addf %17, %19 : vector<1x8xf32>
    %c0_13 = arith.constant 0 : index
    %c0_14 = arith.constant 0 : index
    %21 = vector.load %arg7[%c0_13, %c0_14] : memref<1x8xf32, #tpu.memory_space<vmem>>, vector<1x8xf32>
    tpu.vector_store %arg7[%c0_13, %c0_14], %20 {strides = array<i32>} : memref<1x8xf32, #tpu.memory_space<vmem>>, vector<1x8xf32>,
    return
  }
  func.func @transform_0(%arg0: i32) -> (i32, i32) {
    %c0_i32 = arith.constant 0 : i32
    %c0_i32_0 = arith.constant 0 : i32
    return %arg0, %c0_i32 : i32, i32
  }
  func.func @transform_1(%arg0: i32) -> (i32, i32) {
    %c0_i32 = arith.constant 0 : i32
    %c0_i32_0 = arith.constant 0 : i32
    %c0_i32_1 = arith.constant 0 : i32
    return %c0_i32, %c0_i32_0 : i32, i32
  }
  func.func @transform_2(%arg0: i32) -> (i32, i32) {
    %c0_i32 = arith.constant 0 : i32
    %c0_i32_0 = arith.constant 0 : i32
    %c0_i32_1 = arith.constant 0 : i32
    return %c0_i32, %c0_i32_0 : i32, i32
  }
  func.func @transform_3(%arg0: i32) -> (i32, i32) {
    %c0_i32 = arith.constant 0 : i32
    %c0_i32_0 = arith.constant 0 : i32
    %c0_i32_1 = arith.constant 0 : i32
    return %c0_i32, %c0_i32_0 : i32, i32
  }
  func.func @transform_4(%arg0: i32) -> (i32, i32) {
    %c0_i32 = arith.constant 0 : i32
    %c0_i32_0 = arith.constant 0 : i32
    %c0_i32_1 = arith.constant 0 : i32
    return %c0_i32, %c0_i32_0 : i32, i32
  }
  func.func @transform_5(%arg0: i32) -> i32 {
    %c0_i32 = arith.constant 0 : i32
    %c0_i32_0 = arith.constant 0 : i32
    return %c0_i32 : i32
  }
  func.func @transform_6(%arg0: i32) -> (i32, i32) {
    %c0_i32 = arith.constant 0 : i32
    %c0_i32_0 = arith.constant 0 : i32
    return %c0_i32, %arg0 : i32, i32
  }
}

</mosaic_0001>

<llo_original>
// kernel: tpu_custom_call.1
$region0: #{tpu_custom_call.1}
  #allocation0 [shape = 'u32[]', space=smem, size = 0x4, offset = 0x4, fixed_abs, tag = 'smem constant byte address 0x4 - core index']
  #allocation1 [shape = 'u32[144,128]{1,0:T(1,128)}', space=vmem, size = 0x12000, scoped, tag = 'internal scratch']
  #allocation2 [shape = 'f32[1]{0:T(128)S(6)}', space=smem, size = 0x200, scoped, tag = 'scoped memory for tpu_custom_call.1']
  %s0 = inlined_call_operand.vmem [shape: f32[8,16], index: 0, kind: input, shape index: {}]
  %s1 = inlined_call_operand.vmem [shape: f32[32,16], index: 1, kind: input, shape index: {}]
  %s2 = inlined_call_operand.vmem [shape: f32[32,32], index: 2, kind: input, shape index: {}]
  %s3 = inlined_call_operand.vmem [shape: f32[32,1], index: 3, kind: input, shape index: {}]
  %s4 = inlined_call_operand.vmem [shape: f32[32,2], index: 4, kind: input, shape index: {}]
  %s5 = inlined_call_operand.<no memory space> [shape: f32[1], index: 5, kind: input, shape index: {}]
  %s6 = inlined_call_operand.hbm [shape: f32[1,8], index: 6, kind: output, shape index: {}]
  %s7 = sld [smem:[#allocation0]]
  $region34: #{tpu_custom_call.1} parent=0
    _
  %s9 = ssub.s32 1, %s7
  %s10 = scalar_select 0, %s9, %s7
  %11 = sst [smem:[#allocation2]] %s5
  $region1: #{tpu_custom_call.1} parent=0
    #allocation3 [shape = 'u8[512]{0}', space=vmem, size = 0x400, scoped, tag = 'output window, operand 0, single buffered']
    #allocation4 [shape = 's32[1]{0}', space=sflag, size = 0x4, scoped, tag = 'scoped memory for tpu_custom_call.1']
    %12 = vsyncpa [#allocation4], 0
    // Predicated region
    $region2: #{tpu_custom_call.1} parent=1 // pred_check
      _
    $region3: #{tpu_custom_call.1} parent=1 // pred_check_branch
      %14 = sbr.rel (0) target = $region5
    $region4: #{tpu_custom_call.1} parent=1 // pred_region
      _
    $region5: #{tpu_custom_call.1} parent=1 // pred_fallthru
      _
    // Predicated region
    $region6: #{tpu_custom_call.1} parent=1 // pred_check
      _
    $region7: #{tpu_custom_call.1} parent=1 // pred_check_branch
      %16 = sbr.rel (0) target = $region9
    $region8: #{tpu_custom_call.1} parent=1 // pred_region
      _
    $region9: #{tpu_custom_call.1} parent=1 // pred_fallthru
      _
    // Predicated region
    $region10: #{tpu_custom_call.1} parent=1 // pred_check
      _
    $region11: #{tpu_custom_call.1} parent=1 // pred_check_branch
      %18 = sbr.rel (0) target = $region13
    $region12: #{tpu_custom_call.1} parent=1 // pred_region
      _
    $region13: #{tpu_custom_call.1} parent=1 // pred_fallthru
      _
    // Predicated region
    $region14: #{tpu_custom_call.1} parent=1 // pred_check
      _
    $region15: #{tpu_custom_call.1} parent=1 // pred_check_branch
      %20 = sbr.rel (0) target = $region17
    $region16: #{tpu_custom_call.1} parent=1 // pred_region
      _
    $region17: #{tpu_custom_call.1} parent=1 // pred_fallthru
      _
    // Predicated region
    $region18: #{tpu_custom_call.1} parent=1 // pred_check
      _
    $region19: #{tpu_custom_call.1} parent=1 // pred_check_branch
      %22 = sbr.rel (0) target = $region21
    $region20: #{tpu_custom_call.1} parent=1 // pred_region
      _
    $region21: #{tpu_custom_call.1} parent=1 // pred_fallthru
      _
    // Predicated region
    $region22: #{tpu_custom_call.1} parent=1 // pred_check
      _
    $region23: #{tpu_custom_call.1} parent=1 // pred_check_branch
      %24 = sbr.rel (0) target = $region25
    $region24: #{tpu_custom_call.1} parent=1 // pred_region
      _
    $region25: #{tpu_custom_call.1} parent=1 // pred_fallthru
      _
    %v25 = vld [vmem:[%s0] sm:$0xff]
    %v26 = vld [vmem:[%s4] sm:$0xff]
    %v27 = vld [vmem:[%s4 + $0x8] sm:$0xff]
    %v28 = vld [vmem:[%s4 + $0x10] sm:$0xff]
    %v29 = vld [vmem:[%s4 + $0x18] sm:$0xff]
    %v30 = vld [vmem:[%s1] sm:$0xff]
    %v31 = vld [vmem:[%s1 + $0x8] sm:$0xff]
    %v32 = vld [vmem:[%s1 + $0x10] sm:$0xff]
    %v33 = vld [vmem:[%s1 + $0x18] sm:$0xff]
    %35 = vset.pattern.permute.xlu0 0
    %36 = vperm.xlu0 %35, %v26
    %v37 = vpop.permute.xlu0 %36
    %40 = vset.pattern.permute.xlu0 0
    %41 = vperm.xlu0 %40, %v27
    %v42 = vpop.permute.xlu0 %41
    %45 = vset.pattern.permute.xlu0 0
    %46 = vperm.xlu0 %45, %v28
    %v47 = vpop.permute.xlu0 %46
    %50 = vset.pattern.permute.xlu0 0
    %51 = vperm.xlu0 %50, %v29
    %v52 = vpop.permute.xlu0 %51
    %vm54 = vcmask 130048
    %v56 = vsel %vm54, %v30, 0
    %v59 = vsel %vm54, %v31, 0
    %v62 = vsel %vm54, %v32, 0
    %v65 = vsel %vm54, %v33, 0
    %v68 = vsel %vm54, %v25, 0
    %70 = vmatprep.subr.mxu0 0.0
    %71 = vmatpush1.xpose.msra.mxu0 %v68
    %72 = vmatprep.subr.mxu0 0.0
    %73 = vmatpush1.xpose.msra.mxu0 0.0
    %74 = vmatprep.subr.mxu0 0.0
    %75 = vmatpush1.xpose.msra.mxu0 0.0
    %76 = vmatprep.subr.mxu0 0.0
    %77 = vmatpush1.xpose.msra.mxu0 0.0
    %78 = vmatprep.subr.mxu0 0.0
    %79 = vmatpush1.xpose.msra.mxu0 0.0
    %80 = vmatprep.subr.mxu0 0.0
    %81 = vmatpush1.xpose.msra.mxu0 0.0
    %82 = vmatprep.subr.mxu0 0.0
    %83 = vmatpush1.xpose.msra.mxu0 0.0
    %84 = vmatprep.subr.mxu0 0.0
    %85 = vmatpush1.xpose.msra.mxu0 0.0
    %86 = vmatprep.subr.mxu0 0.0
    %87 = vmatpush1.xpose.msra.mxu0 0.0
    %88 = vmatprep.subr.mxu0 0.0
    %89 = vmatpush1.xpose.msra.mxu0 0.0
    %90 = vmatprep.subr.mxu0 0.0
    %91 = vmatpush1.xpose.msra.mxu0 0.0
    %92 = vmatprep.subr.mxu0 0.0
    %93 = vmatpush1.xpose.msra.mxu0 0.0
    %94 = vmatprep.subr.mxu0 0.0
    %95 = vmatpush1.xpose.msra.mxu0 0.0
    %96 = vmatprep.subr.mxu0 0.0
    %97 = vmatpush1.xpose.msra.mxu0 0.0
    %98 = vmatprep.subr.mxu0 0.0
    %99 = vmatpush1.xpose.msra.mxu0 0.0
    %100 = vmatprep.subr.mxu0 0.0
    %101 = vmatpush1.xpose.msra.mxu0 0.0
    %102 = vmatprep.subr.mxu0 0.0
    %103 = vmatpush1.xpose.msra.mxu0 0.0
    %104 = vmatprep.subr.mxu0 0.0
    %105 = vmatpush1.xpose.msra.mxu0 0.0
    %106 = vmatprep.subr.mxu0 0.0
    %107 = vmatpush1.xpose.msra.mxu0 0.0
    %108 = vmatprep.subr.mxu0 0.0
    %109 = vmatpush1.xpose.msra.mxu0 0.0
    %110 = vmatprep.subr.mxu0 0.0
    %111 = vmatpush1.xpose.msra.mxu0 0.0
    %112 = vmatprep.subr.mxu0 0.0
    %113 = vmatpush1.xpose.msra.mxu0 0.0
    %114 = vmatprep.subr.mxu0 0.0
    %115 = vmatpush1.xpose.msra.mxu0 0.0
    %116 = vmatprep.subr.mxu0 0.0
    %117 = vmatpush1.xpose.msra.mxu0 0.0
    %118 = vmatprep.subr.mxu0 0.0
    %119 = vmatpush1.xpose.msra.mxu0 0.0
    %120 = vmatprep.subr.mxu0 0.0
    %121 = vmatpush1.xpose.msra.mxu0 0.0
    %122 = vmatprep.subr.mxu0 0.0
    %123 = vmatpush1.xpose.msra.mxu0 0.0
    %124 = vmatprep.subr.mxu0 0.0
    %125 = vmatpush1.xpose.msra.mxu0 0.0
    %126 = vmatprep.subr.mxu0 0.0
    %127 = vmatpush1.xpose.msra.mxu0 0.0
    %128 = vmatprep.subr.mxu0 0.0
    %129 = vmatpush1.xpose.msra.mxu0 0.0
    %130 = vmatprep.subr.mxu0 0.0
    %131 = vmatpush1.xpose.msra.mxu0 0.0
    %132 = vmatprep.subr.mxu0 0.0
    %133 = vmatpush1.xpose.msra.mxu0 0.0
    %134 = vmatprep.mubr.f32.mxu0 0.0
    %135 = vmatmul.mubr.f32.gmra.mrb[0].mxu0 %v56
    %v136 = vpop.f32.mrb[0].mxu0
    %v137 = vadd.f32 %v37, %v136
    %v138 = vpop.f32.mrb[0].mxu0
    %139 = vmatprep.mubr.f32.mxu0 0.0
    %140 = vmatmul.mubr.f32.gmra.mrb[0].mxu0 %v59
    %v141 = vpop.f32.mrb[0].mxu0
    %v142 = vadd.f32 %v42, %v141
    %v143 = vpop.f32.mrb[0].mxu0
    %144 = vmatprep.mubr.f32.mxu0 0.0
    %145 = vmatmul.mubr.f32.gmra.mrb[0].mxu0 %v62
    %v146 = vpop.f32.mrb[0].mxu0
    %v147 = vadd.f32 %v47, %v146
    %v148 = vpop.f32.mrb[0].mxu0
    %149 = vmatprep.mubr.f32.mxu0 0.0
    %150 = vmatmul.mubr.f32.gmra.mrb[0].mxu0 %v65
    %v151 = vpop.f32.mrb[0].mxu0
    %v152 = vadd.f32 %v52, %v151
    %v153 = vpop.f32.mrb[0].mxu0
    %154 = vdwg.mxu0
    %v155 = vtanh.pop %v137
    %v156 = vtanh.pop %v142
    %v157 = vtanh.pop %v147
    %v158 = vtanh.pop %v152
    %v159 = vld [vmem:[%s2] sm:$0xff]
    %v160 = vld [vmem:[%s2 + $0x8] sm:$0xff]
    %v161 = vld [vmem:[%s2 + $0x10] sm:$0xff]
    %v162 = vld [vmem:[%s2 + $0x18] sm:$0xff]
    %163 = vset.pattern.permute.xlu0 1
    %164 = vperm.xlu0 %163, %v26
    %v165 = vpop.permute.xlu0 %164
    %167 = vset.pattern.permute.xlu0 1
    %168 = vperm.xlu0 %167, %v27
    %v169 = vpop.permute.xlu0 %168
    %171 = vset.pattern.permute.xlu0 1
    %172 = vperm.xlu0 %171, %v28
    %v173 = vpop.permute.xlu0 %172
    %175 = vset.pattern.permute.xlu0 1
    %176 = vperm.xlu0 %175, %v29
    %v177 = vpop.permute.xlu0 %176
    %vm179 = vcmask 261120
    %v181 = vsel %vm179, %v159, 0
    %v184 = vsel %vm179, %v160, 0
    %v187 = vsel %vm179, %v161, 0
    %v190 = vsel %vm179, %v162, 0
    %192 = vmatprep.subr.mxu0 0.0
    %193 = vmatpush1.msra.mxu0 %v155
    %194 = vmatprep.subr.mxu0 0.0
    %195 = vmatpush1.msra.mxu0 %v156
    %196 = vmatprep.subr.mxu0 0.0
    %197 = vmatpush1.msra.mxu0 %v157
    %198 = vmatprep.subr.mxu0 0.0
    %199 = vmatpush1.msra.mxu0 %v158
    %200 = vmatprep.subr.mxu0 0.0
    %201 = vmatpush1.msra.mxu0 0.0
    %202 = vmatprep.subr.mxu0 0.0
    %203 = vmatpush1.msra.mxu0 0.0
    %204 = vmatprep.subr.mxu0 0.0
    %205 = vmatpush1.msra.mxu0 0.0
    %206 = vmatprep.subr.mxu0 0.0
    %207 = vmatpush1.msra.mxu0 0.0
    %208 = vmatprep.subr.mxu0 0.0
    %209 = vmatpush1.msra.mxu0 0.0
    %210 = vmatprep.subr.mxu0 0.0
    %211 = vmatpush1.msra.mxu0 0.0
    %212 = vmatprep.subr.mxu0 0.0
    %213 = vmatpush1.msra.mxu0 0.0
    %214 = vmatprep.subr.mxu0 0.0
    %215 = vmatpush1.msra.mxu0 0.0
    %216 = vmatprep.subr.mxu0 0.0
    %217 = vmatpush1.msra.mxu0 0.0
    %218 = vmatprep.subr.mxu0 0.0
    %219 = vmatpush1.msra.mxu0 0.0
    %220 = vmatprep.subr.mxu0 0.0
    %221 = vmatpush1.msra.mxu0 0.0
    %222 = vmatprep.subr.mxu0 0.0
    %223 = vmatpush1.msra.mxu0 0.0
    %224 = vmatprep.subr.mxu0 0.0
    %225 = vmatpush1.msra.mxu0 0.0
    %226 = vmatprep.subr.mxu0 0.0
    %227 = vmatpush1.msra.mxu0 0.0
    %228 = vmatprep.subr.mxu0 0.0
    %229 = vmatpush1.msra.mxu0 0.0
    %230 = vmatprep.subr.mxu0 0.0
    %231 = vmatpush1.msra.mxu0 0.0
    %232 = vmatprep.subr.mxu0 0.0
    %233 = vmatpush1.msra.mxu0 0.0
    %234 = vmatprep.subr.mxu0 0.0
    %235 = vmatpush1.msra.mxu0 0.0
    %236 = vmatprep.subr.mxu0 0.0
    %237 = vmatpush1.msra.mxu0 0.0
    %238 = vmatprep.subr.mxu0 0.0
    %239 = vmatpush1.msra.mxu0 0.0
    %240 = vmatprep.subr.mxu0 0.0
    %241 = vmatpush1.msra.mxu0 0.0
    %242 = vmatprep.subr.mxu0 0.0
    %243 = vmatpush1.msra.mxu0 0.0
    %244 = vmatprep.subr.mxu0 0.0
    %245 = vmatpush1.msra.mxu0 0.0
    %246 = vmatprep.subr.mxu0 0.0
    %247 = vmatpush1.msra.mxu0 0.0
    %248 = vmatprep.subr.mxu0 0.0
    %249 = vmatpush1.msra.mxu0 0.0
    %250 = vmatprep.subr.mxu0 0.0
    %251 = vmatpush1.msra.mxu0 0.0
    %252 = vmatprep.subr.mxu0 0.0
    %253 = vmatpush1.msra.mxu0 0.0
    %254 = vmatprep.subr.mxu0 0.0
    %255 = vmatpush1.msra.mxu0 0.0
    %256 = vmatprep.mubr.f32.mxu0 0.0
    %257 = vmatmul.mubr.f32.gmra.mrb[0].mxu0 %v181
    %v258 = vpop.f32.mrb[0].mxu0
    %v259 = vadd.f32 %v165, %v258
    %v260 = vpop.f32.mrb[0].mxu0
    %261 = vmatprep.mubr.f32.mxu0 0.0
    %262 = vmatmul.mubr.f32.gmra.mrb[0].mxu0 %v184
    %v263 = vpop.f32.mrb[0].mxu0
    %v264 = vadd.f32 %v169, %v263
    %v265 = vpop.f32.mrb[0].mxu0
    %266 = vmatprep.mubr.f32.mxu0 0.0
    %267 = vmatmul.mubr.f32.gmra.mrb[0].mxu0 %v187
    %v268 = vpop.f32.mrb[0].mxu0
    %v269 = vadd.f32 %v173, %v268
    %v270 = vpop.f32.mrb[0].mxu0
    %271 = vmatprep.mubr.f32.mxu0 0.0
    %272 = vmatmul.mubr.f32.gmra.mrb[0].mxu0 %v190
    %v273 = vpop.f32.mrb[0].mxu0
    %v274 = vadd.f32 %v177, %v273
    %v275 = vpop.f32.mrb[0].mxu0
    %276 = vdwg.mxu0
    %v277 = vtanh.pop %v259
    %v278 = vtanh.pop %v264
    %v279 = vtanh.pop %v269
    %v280 = vtanh.pop %v274
    %v281 = vld [vmem:[%s3] sm:$0xff]
    %v282 = vld [vmem:[%s3 + $0x8] sm:$0xff]
    %v283 = vld [vmem:[%s3 + $0x10] sm:$0xff]
    %v284 = vld [vmem:[%s3 + $0x18] sm:$0xff]
    %286 = vset.pattern.permute.xlu0 0
    %287 = vperm.xlu0 %286, %v281
    %v288 = vpop.permute.xlu0 %287
    %291 = vset.pattern.permute.xlu0 0
    %292 = vperm.xlu0 %291, %v282
    %v293 = vpop.permute.xlu0 %292
    %296 = vset.pattern.permute.xlu0 0
    %297 = vperm.xlu0 %296, %v283
    %v298 = vpop.permute.xlu0 %297
    %301 = vset.pattern.permute.xlu0 0
    %302 = vperm.xlu0 %301, %v284
    %v303 = vpop.permute.xlu0 %302
    %v305 = vmul.f32 %v277, %v288
    %v306 = vmul.f32 %v278, %v293
    %v307 = vmul.f32 %v279, %v298
    %v308 = vmul.f32 %v280, %v303
    %vm309 = vcmask 64512
    %v310 = vsel %vm309, %v305, 0.0
    %v311 = vsel %vm309, %v306, 0.0
    %v312 = vadd.f32 %v310, %v311
    %v313 = vsel %vm309, %v307, 0.0
    %v314 = vadd.f32 %v312, %v313
    %v315 = vsel %vm309, %v308, 0.0
    %v316 = vadd.f32 %v314, %v315
    %v317 = vrot.slane %v316, 4
    %v318 = vadd.f32 %v316, %v317
    %v319 = vrot.slane %v318, 2
    %v320 = vadd.f32 %v318, %v319
    %v321 = vrot.slane %v320, 1
    %v322 = vadd.f32 %v320, %v321
    %s323 = sld [smem:[#allocation2]]
    %v324 = vstv %s323
    %v325 = vadd.f32 %v322, %v324
    %vm326 = vcmask 57344
    %327 = vst.msk [vmem:[#allocation3] sm:$0x1] %vm326, %v325
    // Predicated region
    $region26: #{tpu_custom_call.1} parent=1 // pred_check
      _
    $region27: #{tpu_custom_call.1} parent=1 // pred_check_branch
      %329 = sbr.rel (0) target = $region29
    $region28: #{tpu_custom_call.1} parent=1 // pred_region
      %s331 = ssub.s32 16, 16
      %332 = vsyncadd [#allocation4], %s331
      %s334 = sshll.u32 [#allocation3], 4
      %s335 = int_to_ptr.vmem [resolvable:$true] %s334
      %337 = dma.vmem_to_hbm [thread:$0]  %s335, 16, %s6, [#allocation4]
    $region29: #{tpu_custom_call.1} parent=1 // pred_fallthru
      _
    // Predicated region
    $region30: #{tpu_custom_call.1} parent=1 // pred_check
      _
    $region31: #{tpu_custom_call.1} parent=1 // pred_check_branch
      %339 = sbr.rel (0) target = $region33
    $region32: #{tpu_custom_call.1} parent=1 // pred_region
      %340 = dma.done [#allocation4], 16
    $region33: #{tpu_custom_call.1} parent=1 // pred_fallthru
      _
    %341 = vsyncpa [#allocation4], 1

</llo_original>
